<compile_context>
chip_gen: v7x
topology: tpu7x:2x2x1
jax: 0.10.0
libtpu: 0.0.40
codegen_flags: <defaults>
</compile_context>

<pallas_src>
import functools

import jax
import jax.numpy as jnp
from jax.experimental import pallas as pl
from jax.experimental.pallas import tpu as pltpu

LANE = 128


def _round_up(n, m):
    return ((n + m - 1) // m) * m


def _mlp_kernel(x_ref, w1_ref, b1_ref, w2_ref, b2_ref, o_ref):
    # hidden = relu(x @ W1 + b1)   -- all f32 elementwise (v5e fast path)
    h = jnp.dot(x_ref[...], w1_ref[...], preferred_element_type=jnp.float32)
    h = jnp.maximum(h + b1_ref[...], 0.0)           # (TB, Hp) + (1, Hp) broadcast
    # out = hidden @ W2 + b2
    y = jnp.dot(h.astype(w2_ref.dtype), w2_ref[...],
                preferred_element_type=jnp.float32)
    o_ref[...] = (y + b2_ref[...]).astype(o_ref.dtype)   # lane-dense (TB, Op) store


def prepare_params(w1, b1, w2, b2, dtype=jnp.float32):
    """One-time parameter preprocessing (hoisted out of the forward call path).

    Inputs use PyTorch nn.Linear layout: w1 (H, F), b1 (H,), w2 (O, H), b2 (O,).
    Returns lane-dense (in, out)-layout params:
      w1p (F, Hp), b1p (1, Hp), w2p (Hp, Op), b2p (1, Op)  with Hp, Op = ceil/128*128.
    """
    H, F = w1.shape
    O = w2.shape[0]
    Hp = _round_up(H, LANE)
    Op = _round_up(O, LANE)

    w1p = jnp.zeros((F, Hp), dtype).at[:, :H].set(jnp.transpose(w1).astype(dtype))
    b1p = jnp.zeros((1, Hp), dtype).at[0, :H].set(b1.astype(dtype))
    w2p = jnp.zeros((Hp, Op), dtype).at[:H, :O].set(jnp.transpose(w2).astype(dtype))
    b2p = jnp.zeros((1, Op), dtype).at[0, :O].set(b2.astype(dtype))
    return w1p, b1p, w2p, b2p, O


@functools.partial(jax.jit, static_argnames=("n_output",))
def net_forward(x, w1p, b1p, w2p, b2p, *, n_output):
    """x: (B, F) float; params already preprocessed by prepare_params."""
    B, F = x.shape
    Hp = w1p.shape[1]
    Op = w2p.shape[1]

    # Batch tile: bigger tiles once batch is large (amortize per-step overhead,
    # keep stores lane/sublane dense); tiny batches just pad to a multiple of 8.
    if B >= 1024:
        TB = 512
    elif B >= 256:
        TB = 256
    else:
        TB = _round_up(B, 8)
    B_pad = _round_up(B, TB)
    if B_pad != B:
        x = jnp.pad(x, ((0, B_pad - B), (0, 0)))

    grid = (B_pad // TB,)

    out_padded = pl.pallas_call(
        _mlp_kernel,
        out_shape=jax.ShapeDtypeStruct((B_pad, Op), x.dtype),
        grid=grid,
        in_specs=[
            pl.BlockSpec((TB, F), lambda i: (i, 0)),      # x: tiled over batch
            pl.BlockSpec((F, Hp), lambda i: (0, 0)),      # W1: VMEM-resident
            pl.BlockSpec((1, Hp), lambda i: (0, 0)),      # b1: VMEM-resident
            pl.BlockSpec((Hp, Op), lambda i: (0, 0)),     # W2: VMEM-resident
            pl.BlockSpec((1, Op), lambda i: (0, 0)),      # b2: VMEM-resident
        ],
        out_specs=pl.BlockSpec((TB, Op), lambda i: (i, 0)),   # lane-dense output
        compiler_params=pltpu.CompilerParams(
            dimension_semantics=("parallel",),            # shard batch across TCs (v7x)
        ),
    )(x, w1p, b1p, w2p, b2p)

    return out_padded[:B, :n_output]


def net_forward_ref(x, w1, b1, w2, b2):
    h = jnp.maximum(x @ w1.T + b1, 0.0)
    return h @ w2.T + b2


if __name__ == "__main__":
    # Iris-like sizes: 4 features, 32 hidden units, 3 output classes, batch of 8.
    B, F, H, O = 8, 4, 32, 3

    key = jax.random.PRNGKey(0)
    kx, kw1, kb1, kw2, kb2 = jax.random.split(key, 5)

    x = jax.random.normal(kx, (B, F), dtype=jnp.float32)
    # Init mimicking torch.nn.Linear's uniform(-1/sqrt(fan_in), 1/sqrt(fan_in)).
    lim1 = 1.0 / (F ** 0.5)
    lim2 = 1.0 / (H ** 0.5)
    w1 = jax.random.uniform(kw1, (H, F), minval=-lim1, maxval=lim1, dtype=jnp.float32)
    b1 = jax.random.uniform(kb1, (H,),   minval=-lim1, maxval=lim1, dtype=jnp.float32)
    w2 = jax.random.uniform(kw2, (O, H), minval=-lim2, maxval=lim2, dtype=jnp.float32)
    b2 = jax.random.uniform(kb2, (O,),   minval=-lim2, maxval=lim2, dtype=jnp.float32)

    # One-time preprocessing (transpose + lane-dense zero pad), outside the call path.
    w1p, b1p, w2p, b2p, n_out = prepare_params(w1, b1, w2, b2)
    w1p, b1p, w2p, b2p = jax.block_until_ready((w1p, b1p, w2p, b2p))

    out = net_forward(x, w1p, b1p, w2p, b2p, n_output=n_out)
    out = jax.block_until_ready(out)

    ref = net_forward_ref(x, w1, b1, w2, b2)
    assert out.shape == (B, O), out.shape
    assert jnp.allclose(out, ref, atol=1e-5, rtol=1e-5), "mismatch vs reference"

    print("KERNEL_OK")
</pallas_src>

<mosaic_0001>
module attributes {stable_mosaic.version = 11 : i64} {
  func.func @_mlp_kernel(%arg0: i32, %arg1: memref<8x4xf32, #tpu.memory_space<vmem>>, %arg2: memref<4x128xf32, #tpu.memory_space<vmem>>, %arg3: memref<1x128xf32, #tpu.memory_space<vmem>>, %arg4: memref<128x128xf32, #tpu.memory_space<vmem>>, %arg5: memref<1x128xf32, #tpu.memory_space<vmem>>, %arg6: memref<8x128xf32, #tpu.memory_space<vmem>>) attributes {dimension_semantics = [#tpu.dimension_semantics<parallel>], iteration_bounds = array<i64: 1>, scalar_prefetch = 0 : i64, scratch_operands = 0 : i64, tpu.core_type = #tpu.core_type<tc>, window_params = [{transform_indices = @transform_0, window_bounds = array<i64: 8, 4>}, {pipeline_mode = #tpu.pipeline_mode<synchronous>, transform_indices = @transform_1, window_bounds = array<i64: 4, 128>}, {pipeline_mode = #tpu.pipeline_mode<synchronous>, transform_indices = @transform_2, window_bounds = array<i64: 1, 128>}, {pipeline_mode = #tpu.pipeline_mode<synchronous>, transform_indices = @transform_3, window_bounds = array<i64: 128, 128>}, {pipeline_mode = #tpu.pipeline_mode<synchronous>, transform_indices = @transform_4, window_bounds = array<i64: 1, 128>}, {transform_indices = @transform_5, window_bounds = array<i64: 8, 128>}]} {
    %c0 = arith.constant 0 : index
    %c0_0 = arith.constant 0 : index
    %0 = vector.load %arg1[%c0, %c0_0] : memref<8x4xf32, #tpu.memory_space<vmem>>, vector<8x4xf32>
    %c0_1 = arith.constant 0 : index
    %c0_2 = arith.constant 0 : index
    %1 = vector.load %arg2[%c0_1, %c0_2] : memref<4x128xf32, #tpu.memory_space<vmem>>, vector<4x128xf32>
    %cst = arith.constant dense<0.000000e+00> : vector<8x128xf32>
    %2 = tpu.matmul %0, %1, %cst {dimension_numbers = #tpu.dot_dimension_numbers<[1], [0], [0], [1], [0, 0, 1, 1], [], []>} : vector<8x4xf32>, vector<4x128xf32>, vector<8x128xf32> -> vector<8x128xf32>
    %c0_3 = arith.constant 0 : index
    %c0_4 = arith.constant 0 : index
    %3 = vector.load %arg3[%c0_3, %c0_4] : memref<1x128xf32, #tpu.memory_space<vmem>>, vector<1x128xf32>
    %4 = vector.broadcast %3 : vector<1x128xf32> to vector<8x128xf32>
    %5 = arith.addf %2, %4 : vector<8x128xf32>
    %cst_5 = arith.constant 0.000000e+00 : f32
    %6 = vector.broadcast %cst_5 : f32 to vector<8x128xf32>
    %7 = arith.maximumf %5, %6 : vector<8x128xf32>
    %c0_6 = arith.constant 0 : index
    %c0_7 = arith.constant 0 : index
    %8 = vector.load %arg4[%c0_6, %c0_7] : memref<128x128xf32, #tpu.memory_space<vmem>>, vector<128x128xf32>
    %cst_8 = arith.constant dense<0.000000e+00> : vector<8x128xf32>
    %9 = tpu.matmul %7, %8, %cst_8 {dimension_numbers = #tpu.dot_dimension_numbers<[1], [0], [0], [1], [0, 0, 1, 1], [], []>} : vector<8x128xf32>, vector<128x128xf32>, vector<8x128xf32> -> vector<8x128xf32>
    %c0_9 = arith.constant 0 : index
    %c0_10 = arith.constant 0 : index
    %10 = vector.load %arg5[%c0_9, %c0_10] : memref<1x128xf32, #tpu.memory_space<vmem>>, vector<1x128xf32>
    %11 = vector.broadcast %10 : vector<1x128xf32> to vector<8x128xf32>
    %12 = arith.addf %9, %11 : vector<8x128xf32>
    %c0_11 = arith.constant 0 : index
    %c0_12 = arith.constant 0 : index
    %13 = vector.load %arg6[%c0_11, %c0_12] : memref<8x128xf32, #tpu.memory_space<vmem>>, vector<8x128xf32>
    tpu.vector_store %arg6[%c0_11, %c0_12], %12 {strides = array<i32>} : memref<8x128xf32, #tpu.memory_space<vmem>>, vector<8x128xf32>,
    return
  }
  func.func @transform_0(%arg0: i32) -> (i32, i32) {
    %c0_i32 = arith.constant 0 : i32
    %c0_i32_0 = arith.constant 0 : i32
    return %arg0, %c0_i32 : i32, i32
  }
  func.func @transform_1(%arg0: i32) -> (i32, i32) {
    %c0_i32 = arith.constant 0 : i32
    %c0_i32_0 = arith.constant 0 : i32
    %c0_i32_1 = arith.constant 0 : i32
    return %c0_i32, %c0_i32_0 : i32, i32
  }
  func.func @transform_2(%arg0: i32) -> (i32, i32) {
    %c0_i32 = arith.constant 0 : i32
    %c0_i32_0 = arith.constant 0 : i32
    %c0_i32_1 = arith.constant 0 : i32
    return %c0_i32, %c0_i32_0 : i32, i32
  }
  func.func @transform_3(%arg0: i32) -> (i32, i32) {
    %c0_i32 = arith.constant 0 : i32
    %c0_i32_0 = arith.constant 0 : i32
    %c0_i32_1 = arith.constant 0 : i32
    return %c0_i32, %c0_i32_0 : i32, i32
  }
  func.func @transform_4(%arg0: i32) -> (i32, i32) {
    %c0_i32 = arith.constant 0 : i32
    %c0_i32_0 = arith.constant 0 : i32
    %c0_i32_1 = arith.constant 0 : i32
    return %c0_i32, %c0_i32_0 : i32, i32
  }
  func.func @transform_5(%arg0: i32) -> (i32, i32) {
    %c0_i32 = arith.constant 0 : i32
    %c0_i32_0 = arith.constant 0 : i32
    return %arg0, %c0_i32 : i32, i32
  }
}

</mosaic_0001>

<llo_original>
// kernel: net_forward.1
$region0: #{net_forward.1}
  #allocation0 [shape = 'u32[]', space=smem, size = 0x4, offset = 0x4, fixed_abs, tag = 'smem constant byte address 0x4 - core index']
  #allocation1 [shape = 'u32[144,128]{1,0:T(1,128)}', space=vmem, size = 0x12000, scoped, tag = 'internal scratch']
  %s0 = inlined_call_operand.vmem [shape: f32[8,4], index: 0, kind: input, shape index: {}]
  %s1 = inlined_call_operand.vmem [shape: f32[4,128], index: 1, kind: input, shape index: {}]
  %s2 = inlined_call_operand.vmem [shape: f32[1,128], index: 2, kind: input, shape index: {}]
  %s3 = inlined_call_operand.hbm [shape: f32[128,128], index: 3, kind: input, shape index: {}]
  %s4 = inlined_call_operand.vmem [shape: f32[1,128], index: 4, kind: input, shape index: {}]
  %s5 = inlined_call_operand.vmem [shape: f32[8,128], index: 5, kind: output, shape index: {}]
  %s6 = sld [smem:[#allocation0]]
  $region34: #{net_forward.1} parent=0
    _
  %s8 = ssub.s32 1, %s6
  %s9 = scalar_select 0, %s8, %s6
  $region1: #{net_forward.1} parent=0
    #allocation2 [shape = 'u8[65536]{0}', space=vmem, size = 0x10000, scoped, tag = 'input window, operand 3, single buffered']
    #allocation3 [shape = 's32[1]{0}', space=sflag, size = 0x4, scoped, tag = 'scoped memory for net_forward.1']
    %10 = vsyncpa [#allocation3], 0
    // Predicated region
    $region2: #{net_forward.1} parent=1 // pred_check
      _
    $region3: #{net_forward.1} parent=1 // pred_check_branch
      %12 = sbr.rel (0) target = $region5
    $region4: #{net_forward.1} parent=1 // pred_region
      _
    $region5: #{net_forward.1} parent=1 // pred_fallthru
      _
    // Predicated region
    $region6: #{net_forward.1} parent=1 // pred_check
      _
    $region7: #{net_forward.1} parent=1 // pred_check_branch
      %14 = sbr.rel (0) target = $region9
    $region8: #{net_forward.1} parent=1 // pred_region
      _
    $region9: #{net_forward.1} parent=1 // pred_fallthru
      _
    // Predicated region
    $region10: #{net_forward.1} parent=1 // pred_check
      _
    $region11: #{net_forward.1} parent=1 // pred_check_branch
      %16 = sbr.rel (0) target = $region13
    $region12: #{net_forward.1} parent=1 // pred_region
      _
    $region13: #{net_forward.1} parent=1 // pred_fallthru
      _
    // Predicated region
    $region14: #{net_forward.1} parent=1 // pred_check
      _
    $region15: #{net_forward.1} parent=1 // pred_check_branch
      %18 = sbr.rel (0) target = $region17
    $region16: #{net_forward.1} parent=1 // pred_region
      %s20 = ssub.s32 2048, 2048
      %21 = vsyncadd [#allocation3], %s20
      %s22 = sshll.u32 [#allocation2], 4
      %s23 = int_to_ptr.vmem [resolvable:$true] %s22
      %28 = dma.hbm_to_vmem [thread:$0]  %s3, 2048, %s23, [#allocation3], 128, 128, 8
    $region17: #{net_forward.1} parent=1 // pred_fallthru
      _
    // Predicated region
    $region18: #{net_forward.1} parent=1 // pred_check
      _
    $region19: #{net_forward.1} parent=1 // pred_check_branch
      %30 = sbr.rel (0) target = $region21
    $region20: #{net_forward.1} parent=1 // pred_region
      _
    $region21: #{net_forward.1} parent=1 // pred_fallthru
      _
    // Predicated region
    $region22: #{net_forward.1} parent=1 // pred_check
      _
    $region23: #{net_forward.1} parent=1 // pred_check_branch
      %32 = sbr.rel (0) target = $region25
    $region24: #{net_forward.1} parent=1 // pred_region
      %33 = dma.done [#allocation3], 2048
    $region25: #{net_forward.1} parent=1 // pred_fallthru
      _
    %v34 = vld [vmem:[%s0] sm:$0xff]
    %v35 = vld [vmem:[%s1] sm:$0xf]
    %v36 = vld [vmem:[%s2] sm:$0x1]
    %v38 = vlaneseq
    %v39 = vshrl.u32 %v38, 7
    %v40 = vsub.s32 0, %v39
    %v41 = vrot.slane %v36, %v40
    %vm43 = vcmask 31744
    %v45 = vsel %vm43, %v34, 0
    %vm47 = vcmask 1043456
    %v49 = vsel %vm47, %v35, 0
    %51 = vmatprep.subr.mxu0 0.0
    %52 = vmatpush1.msra.mxu0 %v49
    %53 = vmatprep.subr.mxu0 0.0
    %54 = vmatpush1.msra.mxu0 0.0
    %55 = vmatprep.subr.mxu0 0.0
    %56 = vmatpush1.msra.mxu0 0.0
    %57 = vmatprep.subr.mxu0 0.0
    %58 = vmatpush1.msra.mxu0 0.0
    %59 = vmatprep.subr.mxu0 0.0
    %60 = vmatpush1.msra.mxu0 0.0
    %61 = vmatprep.subr.mxu0 0.0
    %62 = vmatpush1.msra.mxu0 0.0
    %63 = vmatprep.subr.mxu0 0.0
    %64 = vmatpush1.msra.mxu0 0.0
    %65 = vmatprep.subr.mxu0 0.0
    %66 = vmatpush1.msra.mxu0 0.0
    %67 = vmatprep.subr.mxu0 0.0
    %68 = vmatpush1.msra.mxu0 0.0
    %69 = vmatprep.subr.mxu0 0.0
    %70 = vmatpush1.msra.mxu0 0.0
    %71 = vmatprep.subr.mxu0 0.0
    %72 = vmatpush1.msra.mxu0 0.0
    %73 = vmatprep.subr.mxu0 0.0
    %74 = vmatpush1.msra.mxu0 0.0
    %75 = vmatprep.subr.mxu0 0.0
    %76 = vmatpush1.msra.mxu0 0.0
    %77 = vmatprep.subr.mxu0 0.0
    %78 = vmatpush1.msra.mxu0 0.0
    %79 = vmatprep.subr.mxu0 0.0
    %80 = vmatpush1.msra.mxu0 0.0
    %81 = vmatprep.subr.mxu0 0.0
    %82 = vmatpush1.msra.mxu0 0.0
    %83 = vmatprep.subr.mxu0 0.0
    %84 = vmatpush1.msra.mxu0 0.0
    %85 = vmatprep.subr.mxu0 0.0
    %86 = vmatpush1.msra.mxu0 0.0
    %87 = vmatprep.subr.mxu0 0.0
    %88 = vmatpush1.msra.mxu0 0.0
    %89 = vmatprep.subr.mxu0 0.0
    %90 = vmatpush1.msra.mxu0 0.0
    %91 = vmatprep.subr.mxu0 0.0
    %92 = vmatpush1.msra.mxu0 0.0
    %93 = vmatprep.subr.mxu0 0.0
    %94 = vmatpush1.msra.mxu0 0.0
    %95 = vmatprep.subr.mxu0 0.0
    %96 = vmatpush1.msra.mxu0 0.0
    %97 = vmatprep.subr.mxu0 0.0
    %98 = vmatpush1.msra.mxu0 0.0
    %99 = vmatprep.subr.mxu0 0.0
    %100 = vmatpush1.msra.mxu0 0.0
    %101 = vmatprep.subr.mxu0 0.0
    %102 = vmatpush1.msra.mxu0 0.0
    %103 = vmatprep.subr.mxu0 0.0
    %104 = vmatpush1.msra.mxu0 0.0
    %105 = vmatprep.subr.mxu0 0.0
    %106 = vmatpush1.msra.mxu0 0.0
    %107 = vmatprep.subr.mxu0 0.0
    %108 = vmatpush1.msra.mxu0 0.0
    %109 = vmatprep.subr.mxu0 0.0
    %110 = vmatpush1.msra.mxu0 0.0
    %111 = vmatprep.subr.mxu0 0.0
    %112 = vmatpush1.msra.mxu0 0.0
    %113 = vmatprep.subr.mxu0 0.0
    %114 = vmatpush1.msra.mxu0 0.0
    %115 = vmatprep.mubr.f32.mxu0 0.0
    %116 = vmatmul.mubr.f32.gmra.mrb[0].mxu0 %v45
    %v117 = vpop.f32.mrb[0].mxu0
    %v118 = vadd.f32 %v41, %v117
    %v119 = vpop.f32.mrb[0].mxu0
    %120 = vdwg.mxu0
    %v121 = vmax.f32 %v118, 0.0
    %v122 = vld [vmem:[#allocation2] sm:$0xff]
    %v123 = vld [vmem:[#allocation2 + $0x8] sm:$0xff]
    %v124 = vld [vmem:[#allocation2 + $0x10] sm:$0xff]
    %v125 = vld [vmem:[#allocation2 + $0x18] sm:$0xff]
    %v126 = vld [vmem:[#allocation2 + $0x20] sm:$0xff]
    %v127 = vld [vmem:[#allocation2 + $0x28] sm:$0xff]
    %v128 = vld [vmem:[#allocation2 + $0x30] sm:$0xff]
    %v129 = vld [vmem:[#allocation2 + $0x38] sm:$0xff]
    %v130 = vld [vmem:[#allocation2 + $0x40] sm:$0xff]
    %v131 = vld [vmem:[#allocation2 + $0x48] sm:$0xff]
    %v132 = vld [vmem:[#allocation2 + $0x50] sm:$0xff]
    %v133 = vld [vmem:[#allocation2 + $0x58] sm:$0xff]
    %v134 = vld [vmem:[#allocation2 + $0x60] sm:$0xff]
    %v135 = vld [vmem:[#allocation2 + $0x68] sm:$0xff]
    %v136 = vld [vmem:[#allocation2 + $0x70] sm:$0xff]
    %v137 = vld [vmem:[#allocation2 + $0x78] sm:$0xff]
    %v138 = vld [vmem:[%s4] sm:$0x1]
    %v140 = vlaneseq
    %v141 = vshrl.u32 %v140, 7
    %v142 = vsub.s32 0, %v141
    %v143 = vrot.slane %v138, %v142
    %145 = vmatprep.subr.mxu0 0.0
    %146 = vmatpush1.msra.mxu0 %v122
    %147 = vmatprep.subr.mxu0 0.0
    %148 = vmatpush1.msra.mxu0 %v123
    %149 = vmatprep.subr.mxu0 0.0
    %150 = vmatpush1.msra.mxu0 %v124
    %151 = vmatprep.subr.mxu0 0.0
    %152 = vmatpush1.msra.mxu0 %v125
    %153 = vmatprep.subr.mxu0 0.0
    %154 = vmatpush1.msra.mxu0 %v126
    %155 = vmatprep.subr.mxu0 0.0
    %156 = vmatpush1.msra.mxu0 %v127
    %157 = vmatprep.subr.mxu0 0.0
    %158 = vmatpush1.msra.mxu0 %v128
    %159 = vmatprep.subr.mxu0 0.0
    %160 = vmatpush1.msra.mxu0 %v129
    %161 = vmatprep.subr.mxu0 0.0
    %162 = vmatpush1.msra.mxu0 %v130
    %163 = vmatprep.subr.mxu0 0.0
    %164 = vmatpush1.msra.mxu0 %v131
    %165 = vmatprep.subr.mxu0 0.0
    %166 = vmatpush1.msra.mxu0 %v132
    %167 = vmatprep.subr.mxu0 0.0
    %168 = vmatpush1.msra.mxu0 %v133
    %169 = vmatprep.subr.mxu0 0.0
    %170 = vmatpush1.msra.mxu0 %v134
    %171 = vmatprep.subr.mxu0 0.0
    %172 = vmatpush1.msra.mxu0 %v135
    %173 = vmatprep.subr.mxu0 0.0
    %174 = vmatpush1.msra.mxu0 %v136
    %175 = vmatprep.subr.mxu0 0.0
    %176 = vmatpush1.msra.mxu0 %v137
    %177 = vmatprep.subr.mxu0 0.0
    %178 = vmatpush1.msra.mxu0 0.0
    %179 = vmatprep.subr.mxu0 0.0
    %180 = vmatpush1.msra.mxu0 0.0
    %181 = vmatprep.subr.mxu0 0.0
    %182 = vmatpush1.msra.mxu0 0.0
    %183 = vmatprep.subr.mxu0 0.0
    %184 = vmatpush1.msra.mxu0 0.0
    %185 = vmatprep.subr.mxu0 0.0
    %186 = vmatpush1.msra.mxu0 0.0
    %187 = vmatprep.subr.mxu0 0.0
    %188 = vmatpush1.msra.mxu0 0.0
    %189 = vmatprep.subr.mxu0 0.0
    %190 = vmatpush1.msra.mxu0 0.0
    %191 = vmatprep.subr.mxu0 0.0
    %192 = vmatpush1.msra.mxu0 0.0
    %193 = vmatprep.subr.mxu0 0.0
    %194 = vmatpush1.msra.mxu0 0.0
    %195 = vmatprep.subr.mxu0 0.0
    %196 = vmatpush1.msra.mxu0 0.0
    %197 = vmatprep.subr.mxu0 0.0
    %198 = vmatpush1.msra.mxu0 0.0
    %199 = vmatprep.subr.mxu0 0.0
    %200 = vmatpush1.msra.mxu0 0.0
    %201 = vmatprep.subr.mxu0 0.0
    %202 = vmatpush1.msra.mxu0 0.0
    %203 = vmatprep.subr.mxu0 0.0
    %204 = vmatpush1.msra.mxu0 0.0
    %205 = vmatprep.subr.mxu0 0.0
    %206 = vmatpush1.msra.mxu0 0.0
    %207 = vmatprep.subr.mxu0 0.0
    %208 = vmatpush1.msra.mxu0 0.0
    %209 = vmatprep.mubr.f32.mxu0 0.0
    %210 = vmatmul.mubr.f32.gmra.mrb[0].mxu0 %v121
    %v211 = vpop.f32.mrb[0].mxu0
    %v212 = vadd.f32 %v143, %v211
    %v213 = vpop.f32.mrb[0].mxu0
    %214 = vdwg.mxu0
    %215 = vst [vmem:[%s5] sm:$0xff] %v212
    // Predicated region
    $region26: #{net_forward.1} parent=1 // pred_check
      _
    $region27: #{net_forward.1} parent=1 // pred_check_branch
      %217 = sbr.rel (0) target = $region29
    $region28: #{net_forward.1} parent=1 // pred_region
      _
    $region29: #{net_forward.1} parent=1 // pred_fallthru
      _
    // Predicated region
    $region30: #{net_forward.1} parent=1 // pred_check
      _
    $region31: #{net_forward.1} parent=1 // pred_check_branch
      %219 = sbr.rel (0) target = $region33
    $region32: #{net_forward.1} parent=1 // pred_region
      _
    $region33: #{net_forward.1} parent=1 // pred_fallthru
      _
    %220 = vsyncpa [#allocation3], 1

</llo_original>
